<compile_context>
chip_gen: v7x
topology: tpu7x:2x2x1
jax: 0.10.0
libtpu: 0.0.40
codegen_flags: <defaults>
</compile_context>

<pallas_src>
import jax
import jax.numpy as jnp
import numpy as np
from jax.experimental import pallas as pl
from jax.experimental.pallas import tpu as pltpu


def _round_up(n, m):
    return ((n + m - 1) // m) * m


# ----------------------------------------------------------------------------- kernel
def embed_att_s1_kernel(x_ref,
                        w_eff_ref, b_eff_ref,
                        w2_ref, b2_ref,
                        w3_ref, b3_ref,
                        wf_ref, bf_ref,
                        o_ref):
    """Fused EmbedATT forward, input_size == 1 (the only shape-valid case).

    One batch tile per grid step; all weights are resident in VMEM across the
    whole grid (index_map pins them to block (0, 0)).
    """
    x = x_ref[...].astype(jnp.float32)                           # (tile_b, 1)

    # Folded affine prefix (embedding -> V -> out-proj -> mean -> Linear(E,128))
    # followed by ReLU: pure VPU broadcast multiply-add, no MXU involvement.
    h = jnp.maximum(x * w_eff_ref[...] + b_eff_ref[...], 0.0)    # (tile_b, 128)

    mm_dt = w2_ref.dtype   # bf16 (default) or f32; accumulation is always f32.

    # Hidden layers 2 and 3: lane-aligned 128x128 matmuls + ReLU
    # (dropout p=0 and no layer-norm in this configuration).
    h = jnp.maximum(
        jnp.dot(h.astype(mm_dt), w2_ref[...],
                preferred_element_type=jnp.float32) + b2_ref[...], 0.0)
    h = jnp.maximum(
        jnp.dot(h.astype(mm_dt), w3_ref[...],
                preferred_element_type=jnp.float32) + b3_ref[...], 0.0)

    # Final layer (optionally padded to a lane-dense 128-wide slab), no activation.
    out = jnp.dot(h.astype(mm_dt), wf_ref[...],
                  preferred_element_type=jnp.float32) + bf_ref[...]
    o_ref[...] = out.astype(o_ref.dtype)


# ----------------------------------------------------------------------------- param prep (once)
def prepare_params(params, num_heads, *, matmul_dtype=jnp.bfloat16, pad_output=True):
    """One-time preprocessing of raw (PyTorch-layout-transposed) parameters.

    Folds the affine prefix into (W_eff, b_eff), optionally pads the final layer
    to a lane-dense 128-wide slab, and casts the remaining 128x128 weights to the
    MXU matmul dtype.  Do this once at init, not per forward call.
    """
    E = params['w_v'].shape[0]
    S = params['w_emb'].shape[0]
    assert E % num_heads == 0, "embed_shape must be divisible by num_heads"
    assert params['w_emb'].shape == (S, S * E)
    assert params['w1'].shape[0] == E * S
    # PyTorch forward is only shape-consistent for input_size == 1 (context=None).
    assert S == 1, "EmbedATT forward requires input_size == 1 (context=None)"

    f32 = jnp.float32
    w_emb, b_emb = params['w_emb'].astype(f32), params['b_emb'].astype(f32)
    w_v, b_v = params['w_v'].astype(f32), params['b_v'].astype(f32)
    w_o, b_o = params['w_o'].astype(f32), params['b_o'].astype(f32)
    w1, b1 = params['w1'].astype(f32), params['b1'].astype(f32)

    # S==1: attn = ((x@We + be)@Wv + bv)@Wo + bo ; mean over 1 token = identity;
    # h1_pre = attn@W1 + b1  =>  h1_pre = x @ W_eff + b_eff with:
    w_eff = w_emb @ w_v @ w_o @ w1                                        # (1, 128)
    b_eff = ((b_emb @ w_v + b_v) @ w_o + b_o) @ w1 + b1                   # (1, 128)

    out_size = params['wf'].shape[-1]
    wf, bf = params['wf'].astype(f32), params['bf'].astype(f32)
    if pad_output:
        out_pad = _round_up(out_size, 128)   # lane-dense store; slice outside
        wf = jnp.pad(wf, ((0, 0), (0, out_pad - out_size)))
        bf = jnp.pad(bf, ((0, 0), (0, out_pad - out_size)))

    return {
        'w_eff': w_eff, 'b_eff': b_eff,                       # stay f32 (VPU path)
        'w2': params['w2'].astype(matmul_dtype), 'b2': params['b2'].astype(f32),
        'w3': params['w3'].astype(matmul_dtype), 'b3': params['b3'].astype(f32),
        'wf': wf.astype(matmul_dtype), 'bf': bf.astype(f32),  # bias f32 (added post-acc)
        'out_size': out_size,
    }


# ----------------------------------------------------------------------------- wrapper
def embed_att_forward(x, prepped, *, batch_tile=1024):
    """Batch-tiled grid, resident weights, (optionally) lane-dense padded output."""
    B, S = x.shape
    assert S == 1
    out_size = prepped['out_size']
    out_w = prepped['wf'].shape[-1]          # padded (128·k) or compact out_size

    # --- batch tile selection -------------------------------------------------
    Bp8 = _round_up(B, 8)
    tile_b = min(_round_up(batch_tile, 8), Bp8)          # always a multiple of 8
    # Keep >= 2 grid steps when the batch allows it, so ("parallel",) semantics
    # can shard the batch across both v7x TensorCores (free on v5e/v6e).
    if Bp8 >= 16:
        tile_b = min(tile_b, _round_up(pl.cdiv(Bp8, 2), 8))
    Bp = _round_up(B, tile_b)
    xp = jnp.pad(x, ((0, Bp - B), (0, 0))) if Bp != B else x
    grid = (Bp // tile_b,)

    weights = (prepped['w_eff'], prepped['b_eff'],
               prepped['w2'], prepped['b2'],
               prepped['w3'], prepped['b3'],
               prepped['wf'], prepped['bf'])
    # Full-array weight blocks pinned to block (0, 0) -> resident across the grid.
    w_specs = [pl.BlockSpec(w.shape, lambda i: (0, 0)) for w in weights]

    out = pl.pallas_call(
        embed_att_s1_kernel,
        out_shape=jax.ShapeDtypeStruct((Bp, out_w), jnp.float32),
        grid=grid,
        in_specs=[pl.BlockSpec((tile_b, S), lambda i: (i, 0))] + w_specs,
        out_specs=pl.BlockSpec((tile_b, out_w), lambda i: (i, 0)),
        compiler_params=pltpu.CompilerParams(
            dimension_semantics=("parallel",),          # megacore sharding on v7x
            vmem_limit_bytes=32 * 1024 * 1024),         # safe on v7x's 64 MiB VMEM
    )(xp, *weights)

    return out[:B, :out_size]


# ----------------------------------------------------------------------------- init & reference
def _dense_init(key, fan_in, fan_out):
    """PyTorch-style uniform(-1/sqrt(fan_in), 1/sqrt(fan_in)); weight stored (in, out)."""
    kw, kb = jax.random.split(key)
    bound = 1.0 / float(np.sqrt(fan_in))
    w = jax.random.uniform(kw, (fan_in, fan_out), jnp.float32, -bound, bound)
    b = jax.random.uniform(kb, (1, fan_out), jnp.float32, -bound, bound)
    return w, b


def init_params(key, input_size, embed_shape, out_size):
    keys = jax.random.split(key, 10)
    p = {}
    p['w_emb'], p['b_emb'] = _dense_init(keys[0], input_size, input_size * embed_shape)
    p['w_q'], p['b_q'] = _dense_init(keys[1], embed_shape, embed_shape)
    p['w_k'], p['b_k'] = _dense_init(keys[2], embed_shape, embed_shape)
    p['w_v'], p['b_v'] = _dense_init(keys[3], embed_shape, embed_shape)
    p['w_o'], p['b_o'] = _dense_init(keys[4], embed_shape, embed_shape)
    p['w1'], p['b1'] = _dense_init(keys[5], embed_shape * input_size, 128)
    p['w2'], p['b2'] = _dense_init(keys[6], 128, 128)
    p['w3'], p['b3'] = _dense_init(keys[7], 128, 128)
    p['wf'], p['bf'] = _dense_init(keys[8], 128, out_size)
    return p


def reference_forward(x, p, num_heads):
    """Pure-JAX mirror of the PyTorch forward (context=None, eval mode), with the
    FULL multi-head attention math — validates both the S==1 degenerate-path
    specialization and the affine-prefix fold used by the kernel."""
    B, S = x.shape
    E = p['w_q'].shape[0]
    Dh = E // num_heads
    emb = (x @ p['w_emb'] + p['b_emb']).reshape(B, S, E)
    q = emb @ p['w_q'] + p['b_q']
    k = emb @ p['w_k'] + p['b_k']
    v = emb @ p['w_v'] + p['b_v']
    qh = q.reshape(B, S, num_heads, Dh).transpose(0, 2, 1, 3)
    kh = k.reshape(B, S, num_heads, Dh).transpose(0, 2, 1, 3)
    vh = v.reshape(B, S, num_heads, Dh).transpose(0, 2, 1, 3)
    s = jnp.einsum('bhqd,bhkd->bhqk', qh, kh) / jnp.sqrt(jnp.float32(Dh))
    pw = jax.nn.softmax(s, axis=-1)
    o = jnp.einsum('bhqk,bhkd->bhqd', pw, vh).transpose(0, 2, 1, 3).reshape(B, S, E)
    o = o @ p['w_o'] + p['b_o']
    h = o.mean(axis=1)
    for wn, bn in (('w1', 'b1'), ('w2', 'b2'), ('w3', 'b3')):
        h = jnp.maximum(h @ p[wn] + p[bn], 0.0)
    return h @ p['wf'] + p['bf']


# ----------------------------------------------------------------------------- self-test
if __name__ == "__main__":
    B = 32                # batch (small test size; tiled to >=2 grid steps)
    IN_SHAPE = 1          # context=None => input_size = in_shape = 1 (shape-required)
    EMBED = 40            # embed_shape, divisible by num_heads=5 (head_dim=8)
    OUT = 6               # np.prod(out_shape)
    NUM_HEADS = 5

    key = jax.random.PRNGKey(0)
    kx, kp = jax.random.split(key)
    x = jax.random.normal(kx, (B, IN_SHAPE), dtype=jnp.float32)
    params = init_params(kp, IN_SHAPE, EMBED, OUT)

    y_ref = reference_forward(x, params, NUM_HEADS)

    # Exact path (f32 matmuls): validates semantics of the fold + kernel tightly.
    prepped_f32 = prepare_params(params, NUM_HEADS, matmul_dtype=jnp.float32)
    y_f32 = jax.block_until_ready(embed_att_forward(x, prepped_f32))
    assert y_f32.shape == (B, OUT)
    np.testing.assert_allclose(np.asarray(y_f32), np.asarray(y_ref),
                               rtol=1e-3, atol=1e-3)

    # Fast path (bf16 MXU operands, f32 accumulation): the production default.
    prepped_bf16 = prepare_params(params, NUM_HEADS, matmul_dtype=jnp.bfloat16)
    y_bf16 = jax.block_until_ready(embed_att_forward(x, prepped_bf16))
    assert y_bf16.shape == (B, OUT)
    np.testing.assert_allclose(np.asarray(y_bf16), np.asarray(y_ref),
                               rtol=5e-2, atol=5e-2)

    print("KERNEL_OK")
</pallas_src>

<mosaic_0001>
module attributes {stable_mosaic.version = 11 : i64} {
  func.func @embed_att_s1_kernel(%arg0: i32, %arg1: memref<16x1xf32, #tpu.memory_space<vmem>>, %arg2: memref<1x128xf32, #tpu.memory_space<vmem>>, %arg3: memref<1x128xf32, #tpu.memory_space<vmem>>, %arg4: memref<128x128xf32, #tpu.memory_space<vmem>>, %arg5: memref<1x128xf32, #tpu.memory_space<vmem>>, %arg6: memref<128x128xf32, #tpu.memory_space<vmem>>, %arg7: memref<1x128xf32, #tpu.memory_space<vmem>>, %arg8: memref<128x128xf32, #tpu.memory_space<vmem>>, %arg9: memref<1x128xf32, #tpu.memory_space<vmem>>, %arg10: memref<16x128xf32, #tpu.memory_space<vmem>>) attributes {dimension_semantics = [#tpu.dimension_semantics<parallel>], iteration_bounds = array<i64: 2>, scalar_prefetch = 0 : i64, scratch_operands = 0 : i64, tpu.core_type = #tpu.core_type<tc>, window_params = [{transform_indices = @transform_0, window_bounds = array<i64: 16, 1>}, {pipeline_mode = #tpu.pipeline_mode<synchronous>, transform_indices = @transform_1, window_bounds = array<i64: 1, 128>}, {pipeline_mode = #tpu.pipeline_mode<synchronous>, transform_indices = @transform_2, window_bounds = array<i64: 1, 128>}, {pipeline_mode = #tpu.pipeline_mode<synchronous>, transform_indices = @transform_3, window_bounds = array<i64: 128, 128>}, {pipeline_mode = #tpu.pipeline_mode<synchronous>, transform_indices = @transform_4, window_bounds = array<i64: 1, 128>}, {pipeline_mode = #tpu.pipeline_mode<synchronous>, transform_indices = @transform_5, window_bounds = array<i64: 128, 128>}, {pipeline_mode = #tpu.pipeline_mode<synchronous>, transform_indices = @transform_6, window_bounds = array<i64: 1, 128>}, {pipeline_mode = #tpu.pipeline_mode<synchronous>, transform_indices = @transform_7, window_bounds = array<i64: 128, 128>}, {pipeline_mode = #tpu.pipeline_mode<synchronous>, transform_indices = @transform_8, window_bounds = array<i64: 1, 128>}, {transform_indices = @transform_9, window_bounds = array<i64: 16, 128>}]} {
    %c0 = arith.constant 0 : index
    %c0_0 = arith.constant 0 : index
    %0 = vector.load %arg1[%c0, %c0_0] : memref<16x1xf32, #tpu.memory_space<vmem>>, vector<16x1xf32>
    %c0_1 = arith.constant 0 : index
    %c0_2 = arith.constant 0 : index
    %1 = vector.load %arg2[%c0_1, %c0_2] : memref<1x128xf32, #tpu.memory_space<vmem>>, vector<1x128xf32>
    %2 = vector.broadcast %0 : vector<16x1xf32> to vector<16x128xf32>
    %3 = vector.broadcast %1 : vector<1x128xf32> to vector<16x128xf32>
    %4 = arith.mulf %2, %3 : vector<16x128xf32>
    %c0_3 = arith.constant 0 : index
    %c0_4 = arith.constant 0 : index
    %5 = vector.load %arg3[%c0_3, %c0_4] : memref<1x128xf32, #tpu.memory_space<vmem>>, vector<1x128xf32>
    %6 = vector.broadcast %5 : vector<1x128xf32> to vector<16x128xf32>
    %7 = arith.addf %4, %6 : vector<16x128xf32>
    %cst = arith.constant 0.000000e+00 : f32
    %8 = vector.broadcast %cst : f32 to vector<16x128xf32>
    %9 = arith.maximumf %7, %8 : vector<16x128xf32>
    %c0_5 = arith.constant 0 : index
    %c0_6 = arith.constant 0 : index
    %10 = vector.load %arg4[%c0_5, %c0_6] : memref<128x128xf32, #tpu.memory_space<vmem>>, vector<128x128xf32>
    %cst_7 = arith.constant dense<0.000000e+00> : vector<16x128xf32>
    %11 = tpu.matmul %9, %10, %cst_7 {dimension_numbers = #tpu.dot_dimension_numbers<[1], [0], [0], [1], [0, 0, 1, 1], [], []>} : vector<16x128xf32>, vector<128x128xf32>, vector<16x128xf32> -> vector<16x128xf32>
    %c0_8 = arith.constant 0 : index
    %c0_9 = arith.constant 0 : index
    %12 = vector.load %arg5[%c0_8, %c0_9] : memref<1x128xf32, #tpu.memory_space<vmem>>, vector<1x128xf32>
    %13 = vector.broadcast %12 : vector<1x128xf32> to vector<16x128xf32>
    %14 = arith.addf %11, %13 : vector<16x128xf32>
    %cst_10 = arith.constant 0.000000e+00 : f32
    %15 = vector.broadcast %cst_10 : f32 to vector<16x128xf32>
    %16 = arith.maximumf %14, %15 : vector<16x128xf32>
    %c0_11 = arith.constant 0 : index
    %c0_12 = arith.constant 0 : index
    %17 = vector.load %arg6[%c0_11, %c0_12] : memref<128x128xf32, #tpu.memory_space<vmem>>, vector<128x128xf32>
    %cst_13 = arith.constant dense<0.000000e+00> : vector<16x128xf32>
    %18 = tpu.matmul %16, %17, %cst_13 {dimension_numbers = #tpu.dot_dimension_numbers<[1], [0], [0], [1], [0, 0, 1, 1], [], []>} : vector<16x128xf32>, vector<128x128xf32>, vector<16x128xf32> -> vector<16x128xf32>
    %c0_14 = arith.constant 0 : index
    %c0_15 = arith.constant 0 : index
    %19 = vector.load %arg7[%c0_14, %c0_15] : memref<1x128xf32, #tpu.memory_space<vmem>>, vector<1x128xf32>
    %20 = vector.broadcast %19 : vector<1x128xf32> to vector<16x128xf32>
    %21 = arith.addf %18, %20 : vector<16x128xf32>
    %cst_16 = arith.constant 0.000000e+00 : f32
    %22 = vector.broadcast %cst_16 : f32 to vector<16x128xf32>
    %23 = arith.maximumf %21, %22 : vector<16x128xf32>
    %c0_17 = arith.constant 0 : index
    %c0_18 = arith.constant 0 : index
    %24 = vector.load %arg8[%c0_17, %c0_18] : memref<128x128xf32, #tpu.memory_space<vmem>>, vector<128x128xf32>
    %cst_19 = arith.constant dense<0.000000e+00> : vector<16x128xf32>
    %25 = tpu.matmul %23, %24, %cst_19 {dimension_numbers = #tpu.dot_dimension_numbers<[1], [0], [0], [1], [0, 0, 1, 1], [], []>} : vector<16x128xf32>, vector<128x128xf32>, vector<16x128xf32> -> vector<16x128xf32>
    %c0_20 = arith.constant 0 : index
    %c0_21 = arith.constant 0 : index
    %26 = vector.load %arg9[%c0_20, %c0_21] : memref<1x128xf32, #tpu.memory_space<vmem>>, vector<1x128xf32>
    %27 = vector.broadcast %26 : vector<1x128xf32> to vector<16x128xf32>
    %28 = arith.addf %25, %27 : vector<16x128xf32>
    %c0_22 = arith.constant 0 : index
    %c0_23 = arith.constant 0 : index
    %29 = vector.load %arg10[%c0_22, %c0_23] : memref<16x128xf32, #tpu.memory_space<vmem>>, vector<16x128xf32>
    tpu.vector_store %arg10[%c0_22, %c0_23], %28 {strides = array<i32>} : memref<16x128xf32, #tpu.memory_space<vmem>>, vector<16x128xf32>,
    return
  }
  func.func @transform_0(%arg0: i32) -> (i32, i32) {
    %c0_i32 = arith.constant 0 : i32
    %c0_i32_0 = arith.constant 0 : i32
    return %arg0, %c0_i32 : i32, i32
  }
  func.func @transform_1(%arg0: i32) -> (i32, i32) {
    %c0_i32 = arith.constant 0 : i32
    %c0_i32_0 = arith.constant 0 : i32
    %c0_i32_1 = arith.constant 0 : i32
    return %c0_i32, %c0_i32_0 : i32, i32
  }
  func.func @transform_2(%arg0: i32) -> (i32, i32) {
    %c0_i32 = arith.constant 0 : i32
    %c0_i32_0 = arith.constant 0 : i32
    %c0_i32_1 = arith.constant 0 : i32
    return %c0_i32, %c0_i32_0 : i32, i32
  }
  func.func @transform_3(%arg0: i32) -> (i32, i32) {
    %c0_i32 = arith.constant 0 : i32
    %c0_i32_0 = arith.constant 0 : i32
    %c0_i32_1 = arith.constant 0 : i32
    return %c0_i32, %c0_i32_0 : i32, i32
  }
  func.func @transform_4(%arg0: i32) -> (i32, i32) {
    %c0_i32 = arith.constant 0 : i32
    %c0_i32_0 = arith.constant 0 : i32
    %c0_i32_1 = arith.constant 0 : i32
    return %c0_i32, %c0_i32_0 : i32, i32
  }
  func.func @transform_5(%arg0: i32) -> (i32, i32) {
    %c0_i32 = arith.constant 0 : i32
    %c0_i32_0 = arith.constant 0 : i32
    %c0_i32_1 = arith.constant 0 : i32
    return %c0_i32, %c0_i32_0 : i32, i32
  }
  func.func @transform_6(%arg0: i32) -> (i32, i32) {
    %c0_i32 = arith.constant 0 : i32
    %c0_i32_0 = arith.constant 0 : i32
    %c0_i32_1 = arith.constant 0 : i32
    return %c0_i32, %c0_i32_0 : i32, i32
  }
  func.func @transform_7(%arg0: i32) -> (i32, i32) {
    %c0_i32 = arith.constant 0 : i32
    %c0_i32_0 = arith.constant 0 : i32
    %c0_i32_1 = arith.constant 0 : i32
    return %c0_i32, %c0_i32_0 : i32, i32
  }
  func.func @transform_8(%arg0: i32) -> (i32, i32) {
    %c0_i32 = arith.constant 0 : i32
    %c0_i32_0 = arith.constant 0 : i32
    %c0_i32_1 = arith.constant 0 : i32
    return %c0_i32, %c0_i32_0 : i32, i32
  }
  func.func @transform_9(%arg0: i32) -> (i32, i32) {
    %c0_i32 = arith.constant 0 : i32
    %c0_i32_0 = arith.constant 0 : i32
    return %arg0, %c0_i32 : i32, i32
  }
}

</mosaic_0001>

<llo_original>
// kernel: tpu_custom_call.1
$region0: #{tpu_custom_call.1}
  #allocation0 [shape = 'u32[]', space=smem, size = 0x4, offset = 0x4, fixed_abs, tag = 'smem constant byte address 0x4 - core index']
  #allocation1 [shape = 'u32[144,128]{1,0:T(1,128)}', space=vmem, size = 0x12000, scoped, tag = 'internal scratch']
  %s0 = inlined_call_operand.vmem [shape: f32[32,1], index: 0, kind: input, shape index: {}]
  %s1 = inlined_call_operand.vmem [shape: f32[1,128], index: 1, kind: input, shape index: {}]
  %s2 = inlined_call_operand.vmem [shape: f32[1,128], index: 2, kind: input, shape index: {}]
  %s3 = inlined_call_operand.hbm [shape: f32[128,128], index: 3, kind: input, shape index: {}]
  %s4 = inlined_call_operand.vmem [shape: f32[1,128], index: 4, kind: input, shape index: {}]
  %s5 = inlined_call_operand.hbm [shape: f32[128,128], index: 5, kind: input, shape index: {}]
  %s6 = inlined_call_operand.vmem [shape: f32[1,128], index: 6, kind: input, shape index: {}]
  %s7 = inlined_call_operand.hbm [shape: f32[128,128], index: 7, kind: input, shape index: {}]
  %s8 = inlined_call_operand.vmem [shape: f32[1,128], index: 8, kind: input, shape index: {}]
  %s9 = inlined_call_operand.hbm [shape: f32[32,128], index: 9, kind: output, shape index: {}]
  %s10 = sld [smem:[#allocation0]]
  $region81: #{tpu_custom_call.1} parent=0
    _
  %s12 = ssub.s32 1, %s10
  %s13 = scalar_select 0, %s12, %s10
  $region1: #{tpu_custom_call.1} parent=0
    #allocation2 [shape = 'u8[65536]{0}', space=vmem, size = 0x10000, scoped, tag = 'input window, operand 3, single buffered']
    #allocation3 [shape = 's32[2]{0}', space=sflag, size = 0x8, scoped, tag = 'scoped memory for tpu_custom_call.1']
    #allocation4 [shape = 's32[2]{0}', space=sflag, size = 0x8, scoped, tag = 'scoped memory for tpu_custom_call.1']
    #allocation5 [shape = 'u8[65536]{0}', space=vmem, size = 0x10000, scoped, tag = 'input window, operand 5, single buffered']
    #allocation6 [shape = 's32[1]{0}', space=sflag, size = 0x4, scoped, tag = 'scoped memory for tpu_custom_call.1']
    #allocation7 [shape = 'u8[65536]{0}', space=vmem, size = 0x10000, scoped, tag = 'input window, operand 7, single buffered']
    #allocation8 [shape = 'u8[16384]{0}', space=vmem, size = 0x4000, scoped, tag = 'output window, operand 0']
    %14 = vsyncpa [#allocation3], 0
    %15 = vsyncpa [#allocation6], 0
    %16 = vsyncpa [#allocation4], 0
    %s17 = scalar_lea.sflag [#allocation4], 1
    %18 = vsyncpa %s17, 0
    loop: start=0, step=1, limit=4
    $region2: #{tpu_custom_call.1} parent=1 // loop_pre_header
      _
    $region3: #{tpu_custom_call.1} parent=1 // loop_header
      %s20 = sphi 0, %s24
      %p21 = scmp.ge.s32.totalorder %s20, 4
      %s30 = sphi 0, %s32
      %s33 = sphi 0, %s30
      %s34 = sphi 0, %s33
      %s50 = sphi 0, %s34
      %s54 = sphi 0, %s54
      %s56 = sphi 0, %s54
      %s57 = sphi 0, %s56
      %s71 = sphi 0, %s57
      %s75 = sphi 0, %s75
      %s77 = sphi 0, %s75
      %s78 = sphi 0, %s77
      %s92 = sphi 0, %s78
      %s96 = sphi 0, %s96
      %s98 = sphi 0, %s96
      %s99 = sphi 0, %s98
      %s113 = sphi 0, %s99
      %s117 = sphi 0, %s117
      %s119 = sphi 0, %s117
      %s120 = sphi 0, %s119
      %s134 = sphi 0, %s120
      %s138 = sphi 0, %s138
      %s140 = sphi 0, %s138
      %s141 = sphi 0, %s140
      %s155 = sphi 0, %s141
      %s159 = sphi 0, %s159
      %s161 = sphi 0, %s159
      %s162 = sphi 0, %s161
      %s176 = sphi 0, %s162
      %s180 = sphi 0, %s180
      %s182 = sphi 0, %s180
      %s183 = sphi 0, %s182
      %s197 = sphi 0, %s183
      %s201 = sphi 0, %s201
      %s203 = sphi 0, %s201
      %s204 = sphi 0, %s203
      %s218 = sphi 0, %s204
      %s224 = sphi 0, %s226
      %s227 = sphi 0, %s224
      %s228 = sphi 0, %s227
      %s244 = sphi 0, %s228
    $region4: #{tpu_custom_call.1} parent=1 // loop_header_branch
      %23 = sbr.rel (%p21) target = $region8
    $region5: #{tpu_custom_call.1} parent=1 // loop_body
      %s25 = ssub.s32 %s20, 1
      %s26 = ssub.s32 %s20, 2
      %s27 = sadd.s32 %s20, 1
      %s28 = ssub.s32 %s20, %s27
      %p29 = scmp.eq.s32.totalorder %s28, 0
      %s31 = sadd.s32 %s30, 1
      %s32 = scalar_select %p29, %s30, %s31
      %p35 = pneg %p29
      %p36 = scmp.eq.s32.totalorder %s20, 1
      %p37 = por %p35, %p36
      %p38 = scmp.ne.s32.totalorder %s30, %s33
      %p39 = scmp.eq.s32.totalorder %s20, 0
      %p40 = por %p38, %p39
      %p41 = scmp.ne.s32.totalorder %s30, %s33
      %p42 = scmp.eq.s32.totalorder %s25, 1
      %p43 = por %p41, %p42
      %p44 = scmp.ne.s32.totalorder %s33, %s34
      %p45 = scmp.eq.s32.totalorder %s25, 0
      %p46 = por %p44, %p45
      %p47 = scmp.ne.s32.totalorder %s33, %s34
      %p48 = scmp.eq.s32.totalorder %s26, 1
      %p49 = por %p47, %p48
      %p51 = scmp.ne.s32.totalorder %s34, %s50
      %p52 = scmp.eq.s32.totalorder %s26, 0
      %p53 = por %p51, %p52
      %s55 = sadd.s32 %s54, 1
      %p58 = scmp.eq.s32.totalorder %s20, 1
      %p59 = scmp.ne.s32.totalorder %s54, %s56
      %p60 = scmp.eq.s32.totalorder %s20, 0
      %p61 = por %p59, %p60
      %p62 = scmp.ne.s32.totalorder %s54, %s56
      %p63 = scmp.eq.s32.totalorder %s25, 1
      %p64 = por %p62, %p63
      %p65 = scmp.ne.s32.totalorder %s56, %s57
      %p66 = scmp.eq.s32.totalorder %s25, 0
      %p67 = por %p65, %p66
      %p68 = scmp.ne.s32.totalorder %s56, %s57
      %p69 = scmp.eq.s32.totalorder %s26, 1
      %p70 = por %p68, %p69
      %p72 = scmp.ne.s32.totalorder %s57, %s71
      %p73 = scmp.eq.s32.totalorder %s26, 0
      %p74 = por %p72, %p73
      %s76 = sadd.s32 %s75, 1
      %p79 = scmp.eq.s32.totalorder %s20, 1
      %p80 = scmp.ne.s32.totalorder %s75, %s77
      %p81 = scmp.eq.s32.totalorder %s20, 0
      %p82 = por %p80, %p81
      %p83 = scmp.ne.s32.totalorder %s75, %s77
      %p84 = scmp.eq.s32.totalorder %s25, 1
      %p85 = por %p83, %p84
      %p86 = scmp.ne.s32.totalorder %s77, %s78
      %p87 = scmp.eq.s32.totalorder %s25, 0
      %p88 = por %p86, %p87
      %p89 = scmp.ne.s32.totalorder %s77, %s78
      %p90 = scmp.eq.s32.totalorder %s26, 1
      %p91 = por %p89, %p90
      %p93 = scmp.ne.s32.totalorder %s78, %s92
      %p94 = scmp.eq.s32.totalorder %s26, 0
      %p95 = por %p93, %p94
      %s97 = sadd.s32 %s96, 1
      %p100 = scmp.eq.s32.totalorder %s20, 1
      %p101 = scmp.ne.s32.totalorder %s96, %s98
      %p102 = scmp.eq.s32.totalorder %s20, 0
      %p103 = por %p101, %p102
      %p104 = scmp.ne.s32.totalorder %s96, %s98
      %p105 = scmp.eq.s32.totalorder %s25, 1
      %p106 = por %p104, %p105
      %p107 = scmp.ne.s32.totalorder %s98, %s99
      %p108 = scmp.eq.s32.totalorder %s25, 0
      %p109 = por %p107, %p108
      %p110 = scmp.ne.s32.totalorder %s98, %s99
      %p111 = scmp.eq.s32.totalorder %s26, 1
      %p112 = por %p110, %p111
      %p114 = scmp.ne.s32.totalorder %s99, %s113
      %p115 = scmp.eq.s32.totalorder %s26, 0
      %p116 = por %p114, %p115
      %s118 = sadd.s32 %s117, 1
      %p121 = scmp.eq.s32.totalorder %s20, 1
      %p122 = scmp.ne.s32.totalorder %s117, %s119
      %p123 = scmp.eq.s32.totalorder %s20, 0
      %p124 = por %p122, %p123
      %p125 = scmp.ne.s32.totalorder %s117, %s119
      %p126 = scmp.eq.s32.totalorder %s25, 1
      %p127 = por %p125, %p126
      %p128 = scmp.ne.s32.totalorder %s119, %s120
      %p129 = scmp.eq.s32.totalorder %s25, 0
      %p130 = por %p128, %p129
      %p131 = scmp.ne.s32.totalorder %s119, %s120
      %p132 = scmp.eq.s32.totalorder %s26, 1
      %p133 = por %p131, %p132
      %p135 = scmp.ne.s32.totalorder %s120, %s134
      %p136 = scmp.eq.s32.totalorder %s26, 0
      %p137 = por %p135, %p136
      %s139 = sadd.s32 %s138, 1
      %p142 = scmp.eq.s32.totalorder %s20, 1
      %p143 = scmp.ne.s32.totalorder %s138, %s140
      %p144 = scmp.eq.s32.totalorder %s20, 0
      %p145 = por %p143, %p144
      %p146 = scmp.ne.s32.totalorder %s138, %s140
      %p147 = scmp.eq.s32.totalorder %s25, 1
      %p148 = por %p146, %p147
      %p149 = scmp.ne.s32.totalorder %s140, %s141
      %p150 = scmp.eq.s32.totalorder %s25, 0
      %p151 = por %p149, %p150
      %p152 = scmp.ne.s32.totalorder %s140, %s141
      %p153 = scmp.eq.s32.totalorder %s26, 1
      %p154 = por %p152, %p153
      %p156 = scmp.ne.s32.totalorder %s141, %s155
      %p157 = scmp.eq.s32.totalorder %s26, 0
      %p158 = por %p156, %p157
      %s160 = sadd.s32 %s159, 1
      %p163 = scmp.eq.s32.totalorder %s20, 1
      %p164 = scmp.ne.s32.totalorder %s159, %s161
      %p165 = scmp.eq.s32.totalorder %s20, 0
      %p166 = por %p164, %p165
      %p167 = scmp.ne.s32.totalorder %s159, %s161
      %p168 = scmp.eq.s32.totalorder %s25, 1
      %p169 = por %p167, %p168
      %p170 = scmp.ne.s32.totalorder %s161, %s162
      %p171 = scmp.eq.s32.totalorder %s25, 0
      %p172 = por %p170, %p171
      %p173 = scmp.ne.s32.totalorder %s161, %s162
      %p174 = scmp.eq.s32.totalorder %s26, 1
      %p175 = por %p173, %p174
      %p177 = scmp.ne.s32.totalorder %s162, %s176
      %p178 = scmp.eq.s32.totalorder %s26, 0
      %p179 = por %p177, %p178
      %s181 = sadd.s32 %s180, 1
      %p184 = scmp.eq.s32.totalorder %s20, 1
      %p185 = scmp.ne.s32.totalorder %s180, %s182
      %p186 = scmp.eq.s32.totalorder %s20, 0
      %p187 = por %p185, %p186
      %p188 = scmp.ne.s32.totalorder %s180, %s182
      %p189 = scmp.eq.s32.totalorder %s25, 1
      %p190 = por %p188, %p189
      %p191 = scmp.ne.s32.totalorder %s182, %s183
      %p192 = scmp.eq.s32.totalorder %s25, 0
      %p193 = por %p191, %p192
      %p194 = scmp.ne.s32.totalorder %s182, %s183
      %p195 = scmp.eq.s32.totalorder %s26, 1
      %p196 = por %p194, %p195
      %p198 = scmp.ne.s32.totalorder %s183, %s197
      %p199 = scmp.eq.s32.totalorder %s26, 0
      %p200 = por %p198, %p199
      %s202 = sadd.s32 %s201, 1
      %p205 = scmp.eq.s32.totalorder %s20, 1
      %p206 = scmp.ne.s32.totalorder %s201, %s203
      %p207 = scmp.eq.s32.totalorder %s20, 0
      %p208 = por %p206, %p207
      %p209 = scmp.ne.s32.totalorder %s201, %s203
      %p210 = scmp.eq.s32.totalorder %s25, 1
      %p211 = por %p209, %p210
      %p212 = scmp.ne.s32.totalorder %s203, %s204
      %p213 = scmp.eq.s32.totalorder %s25, 0
      %p214 = por %p212, %p213
      %p215 = scmp.ne.s32.totalorder %s203, %s204
      %p216 = scmp.eq.s32.totalorder %s26, 1
      %p217 = por %p215, %p216
      %p219 = scmp.ne.s32.totalorder %s204, %s218
      %p220 = scmp.eq.s32.totalorder %s26, 0
      %p221 = por %p219, %p220
      %s222 = ssub.s32 %s20, %s27
      %p223 = scmp.eq.s32.totalorder %s222, 0
      %s225 = sadd.s32 %s224, 1
      %s226 = scalar_select %p223, %s224, %s225
      %p229 = pneg %p223
      %p230 = scmp.eq.s32.totalorder %s20, 1
      %p231 = por %p229, %p230
      %p232 = scmp.ne.s32.totalorder %s224, %s227
      %p233 = scmp.eq.s32.totalorder %s20, 0
      %p234 = por %p232, %p233
      %p235 = scmp.ne.s32.totalorder %s224, %s227
      %p236 = scmp.eq.s32.totalorder %s25, 1
      %p237 = por %p235, %p236
      %p238 = scmp.ne.s32.totalorder %s227, %s228
      %p239 = scmp.eq.s32.totalorder %s25, 0
      %p240 = por %p238, %p239
      %p241 = scmp.ne.s32.totalorder %s227, %s228
      %p242 = scmp.eq.s32.totalorder %s26, 1
      %p243 = por %p241, %p242
      %p245 = scmp.ne.s32.totalorder %s228, %s244
      %p246 = scmp.eq.s32.totalorder %s26, 0
      %p247 = por %p245, %p246
      %p248 = scmp.le.s32.totalorder 1, %s20
      %p249 = scmp.lt.s32.totalorder %s20, 3
      %p250 = pnand %p248, %p249
      %p251 = pneg %p250
      // Predicated region
      $region9: #{tpu_custom_call.1} parent=5 // pred_check
        _
      $region10: #{tpu_custom_call.1} parent=5 // pred_check_branch
        %253 = sbr.rel (%p250) target = $region12
      $region11: #{tpu_custom_call.1} parent=5 // pred_region
        %s254 = ssub.s32 %s20, 1
        // Predicated region
        $region13: #{tpu_custom_call.1} parent=11 // pred_check
          %p255 = pneg %p67
        $region14: #{tpu_custom_call.1} parent=11 // pred_check_branch
          %257 = sbr.rel (%p255) target = $region16
        $region15: #{tpu_custom_call.1} parent=11 // pred_region
          _
        $region16: #{tpu_custom_call.1} parent=11 // pred_fallthru
          _
        // Predicated region
        $region17: #{tpu_custom_call.1} parent=11 // pred_check
          %p258 = pneg %p88
        $region18: #{tpu_custom_call.1} parent=11 // pred_check_branch
          %260 = sbr.rel (%p258) target = $region20
        $region19: #{tpu_custom_call.1} parent=11 // pred_region
          _
        $region20: #{tpu_custom_call.1} parent=11 // pred_fallthru
          _
        // Predicated region
        $region21: #{tpu_custom_call.1} parent=11 // pred_check
          %p261 = pneg %p109
        $region22: #{tpu_custom_call.1} parent=11 // pred_check_branch
          %263 = sbr.rel (%p261) target = $region24
        $region23: #{tpu_custom_call.1} parent=11 // pred_region
          %s265 = ssub.s32 2048, 2048
          %266 = vsyncadd [#allocation3], %s265
          %s267 = sshll.u32 [#allocation2], 4
          %s268 = int_to_ptr.vmem [resolvable:$true] %s267
          %273 = dma.hbm_to_vmem [thread:$0]  %s3, 2048, %s268, [#allocation3], 128, 128, 8
        $region24: #{tpu_custom_call.1} parent=11 // pred_fallthru
          _
        // Predicated region
        $region25: #{tpu_custom_call.1} parent=11 // pred_check
          %p274 = pneg %p130
        $region26: #{tpu_custom_call.1} parent=11 // pred_check_branch
          %276 = sbr.rel (%p274) target = $region28
        $region27: #{tpu_custom_call.1} parent=11 // pred_region
          _
        $region28: #{tpu_custom_call.1} parent=11 // pred_fallthru
          _
        // Predicated region
        $region29: #{tpu_custom_call.1} parent=11 // pred_check
          %p277 = pneg %p151
        $region30: #{tpu_custom_call.1} parent=11 // pred_check_branch
          %279 = sbr.rel (%p277) target = $region32
        $region31: #{tpu_custom_call.1} parent=11 // pred_region
          %s281 = ssub.s32 2048, 2048
          %282 = vsyncadd [#allocation6], %s281
          %s283 = sshll.u32 [#allocation5], 4
          %s284 = int_to_ptr.vmem [resolvable:$true] %s283
          %289 = dma.hbm_to_vmem [thread:$0]  %s5, 2048, %s284, [#allocation6], 128, 128, 8
        $region32: #{tpu_custom_call.1} parent=11 // pred_fallthru
          _
        // Predicated region
        $region33: #{tpu_custom_call.1} parent=11 // pred_check
          %p290 = pneg %p172
        $region34: #{tpu_custom_call.1} parent=11 // pred_check_branch
          %292 = sbr.rel (%p290) target = $region36
        $region35: #{tpu_custom_call.1} parent=11 // pred_region
          _
        $region36: #{tpu_custom_call.1} parent=11 // pred_fallthru
          _
        // Predicated region
        $region37: #{tpu_custom_call.1} parent=11 // pred_check
          %p293 = pneg %p193
        $region38: #{tpu_custom_call.1} parent=11 // pred_check_branch
          %295 = sbr.rel (%p293) target = $region40
        $region39: #{tpu_custom_call.1} parent=11 // pred_region
          %s297 = ssub.s32 2048, 2048
          %298 = vsyncadd [#allocation6], %s297
          %s299 = sshll.u32 [#allocation7], 4
          %s300 = int_to_ptr.vmem [resolvable:$true] %s299
          %305 = dma.hbm_to_vmem [thread:$0]  %s7, 2048, %s300, [#allocation6], 128, 128, 8
        $region40: #{tpu_custom_call.1} parent=11 // pred_fallthru
          _
        // Predicated region
        $region41: #{tpu_custom_call.1} parent=11 // pred_check
          %p306 = pneg %p214
        $region42: #{tpu_custom_call.1} parent=11 // pred_check_branch
          %308 = sbr.rel (%p306) target = $region44
        $region43: #{tpu_custom_call.1} parent=11 // pred_region
          _
        $region44: #{tpu_custom_call.1} parent=11 // pred_fallthru
          _
      $region12: #{tpu_custom_call.1} parent=5 // pred_fallthru
        _
      %p309 = scmp.lt.s32.totalorder %s20, 2
      // Predicated region
      $region45: #{tpu_custom_call.1} parent=5 // pred_check
        %p310 = pneg %p309
      $region46: #{tpu_custom_call.1} parent=5 // pred_check_branch
        %312 = sbr.rel (%p310) target = $region48
      $region47: #{tpu_custom_call.1} parent=5 // pred_region
        // Predicated region
        $region49: #{tpu_custom_call.1} parent=47 // pred_check
          %p313 = pneg %p40
        $region50: #{tpu_custom_call.1} parent=47 // pred_check_branch
          %315 = sbr.rel (%p313) target = $region52
        $region51: #{tpu_custom_call.1} parent=47 // pred_region
          %s316 = smul.u32 2, %s20
          %p317 = scmp.lt.s32.totalorder %s316, 3
          %s318 = scalar_select %p317, %s316, 3
          %s319 = smul.addr %s318, 8
          %s320 = scalar_lea.vmem %s0, %s319
          %s321 = smul.u32 2, %s20
        $region52: #{tpu_custom_call.1} parent=47 // pred_fallthru
          _
      $region48: #{tpu_custom_call.1} parent=5 // pred_fallthru
        _
      %p322 = scmp.le.s32.totalorder 1, %s20
      %p323 = scmp.lt.s32.totalorder %s20, 3
      %p324 = pnand %p322, %p323
      %p325 = pneg %p324
      // Predicated region
      $region53: #{tpu_custom_call.1} parent=5 // pred_check
        _
      $region54: #{tpu_custom_call.1} parent=5 // pred_check_branch
        %327 = sbr.rel (%p324) target = $region56
      $region55: #{tpu_custom_call.1} parent=5 // pred_region
        %s328 = ssub.s32 %s20, 1
        // Predicated region
        $region57: #{tpu_custom_call.1} parent=55 // pred_check
          %p329 = pneg %p109
        $region58: #{tpu_custom_call.1} parent=55 // pred_check_branch
          %331 = sbr.rel (%p329) target = $region60
        $region59: #{tpu_custom_call.1} parent=55 // pred_region
          %332 = dma.done [#allocation3], 2048
        $region60: #{tpu_custom_call.1} parent=55 // pred_fallthru
          _
        // Predicated region
        $region61: #{tpu_custom_call.1} parent=55 // pred_check
          %p333 = pneg %p151
        $region62: #{tpu_custom_call.1} parent=55 // pred_check_branch
          %335 = sbr.rel (%p333) target = $region64
        $region63: #{tpu_custom_call.1} parent=55 // pred_region
          %336 = dma.done [#allocation6], 2048
        $region64: #{tpu_custom_call.1} parent=55 // pred_fallthru
          _
        // Predicated region
        $region65: #{tpu_custom_call.1} parent=55 // pred_check
          %p337 = pneg %p193
        $region66: #{tpu_custom_call.1} parent=55 // pred_check_branch
          %339 = sbr.rel (%p337) target = $region68
        $region67: #{tpu_custom_call.1} parent=55 // pred_region
          %340 = dma.done [#allocation6], 2048
        $region68: #{tpu_custom_call.1} parent=55 // pred_fallthru
          _
        %s341 = smul.u32 2, %s25
        %p342 = scmp.lt.s32.totalorder %s341, 3
        %s343 = scalar_select %p342, %s341, 3
        %s344 = smul.addr %s343, 8
        %s345 = scalar_lea.vmem %s0, %s344
        %p346 = pneg %p46
        %p347 = pneg %p43
        %p348 = pneg %p67
        %p349 = pneg %p64
        %p350 = pneg %p88
        %p351 = pneg %p85
        %p352 = pneg %p109
        %p353 = pneg %p106
        %p354 = pneg %p130
        %p355 = pneg %p127
        %p356 = pneg %p151
        %p357 = pneg %p148
        %p358 = pneg %p172
        %p359 = pneg %p169
        %p360 = pneg %p193
        %p361 = pneg %p190
        %p362 = pneg %p214
        %p363 = pneg %p211
        %p364 = pneg %p240
        %p365 = pneg %p237
        %s366 = sand.u32 %s227, 1
        %s367 = scalar_lea.sflag [#allocation4], %s366
        %s368 = sand.u32 %s227, 1
        %s369 = smul.addr %s368, 16
        %s370 = scalar_lea.vmem [#allocation8], %s369
        %s371 = smul.u32 2, %s25
        %p372 = scmp.lt.s32.totalorder %s371, 3
        %s373 = scalar_select %p372, %s371, 3
        %s374 = smul.addr %s373, 8
        %s375 = scalar_lea.vmem %s0, %s374
        %s376 = smul.u32 2, %s25
        %s377 = smul.u32 2, %s25
        %v378 = vld [vmem:[%s375] sm:$0xff]
        %v379 = vld [vmem:[%s375 + $0x8] sm:$0xff]
        %v380 = vld [vmem:[%s1] sm:$0x1]
        %382 = vset.pattern.permute.xlu0 0
        %383 = vperm.xlu0 %382, %v378
        %v384 = vpop.permute.xlu0 %383
        %387 = vset.pattern.permute.xlu0 0
        %388 = vperm.xlu0 %387, %v379
        %v389 = vpop.permute.xlu0 %388
        %v392 = vlaneseq
        %v393 = vshrl.u32 %v392, 7
        %v394 = vsub.s32 0, %v393
        %v395 = vrot.slane %v380, %v394
        %v397 = vmul.f32 %v384, %v395
        %v398 = vmul.f32 %v389, %v395
        %v399 = vld [vmem:[%s2] sm:$0x1]
        %v401 = vlaneseq
        %v402 = vshrl.u32 %v401, 7
        %v403 = vsub.s32 0, %v402
        %v404 = vrot.slane %v399, %v403
        %v406 = vadd.f32 %v397, %v404
        %v407 = vadd.f32 %v398, %v404
        %v408 = vmax.f32 %v406, 0.0
        %v409 = vmax.f32 %v407, 0.0
        %v410 = vld [vmem:[#allocation2] sm:$0xff]
        %v411 = vld [vmem:[#allocation2 + $0x8] sm:$0xff]
        %v412 = vld [vmem:[#allocation2 + $0x10] sm:$0xff]
        %v413 = vld [vmem:[#allocation2 + $0x18] sm:$0xff]
        %v414 = vld [vmem:[#allocation2 + $0x20] sm:$0xff]
        %v415 = vld [vmem:[#allocation2 + $0x28] sm:$0xff]
        %v416 = vld [vmem:[#allocation2 + $0x30] sm:$0xff]
        %v417 = vld [vmem:[#allocation2 + $0x38] sm:$0xff]
        %v418 = vld [vmem:[#allocation2 + $0x40] sm:$0xff]
        %v419 = vld [vmem:[#allocation2 + $0x48] sm:$0xff]
        %v420 = vld [vmem:[#allocation2 + $0x50] sm:$0xff]
        %v421 = vld [vmem:[#allocation2 + $0x58] sm:$0xff]
        %v422 = vld [vmem:[#allocation2 + $0x60] sm:$0xff]
        %v423 = vld [vmem:[#allocation2 + $0x68] sm:$0xff]
        %v424 = vld [vmem:[#allocation2 + $0x70] sm:$0xff]
        %v425 = vld [vmem:[#allocation2 + $0x78] sm:$0xff]
        %v426 = vld [vmem:[%s4] sm:$0x1]
        %v428 = vlaneseq
        %v429 = vshrl.u32 %v428, 7
        %v430 = vsub.s32 0, %v429
        %v431 = vrot.slane %v426, %v430
        %433 = vmatprep.subr.mxu0 0.0
        %434 = vmatpush1.msra.mxu0 %v410
        %435 = vmatprep.subr.mxu0 0.0
        %436 = vmatpush1.msra.mxu0 %v411
        %437 = vmatprep.subr.mxu0 0.0
        %438 = vmatpush1.msra.mxu0 %v412
        %439 = vmatprep.subr.mxu0 0.0
        %440 = vmatpush1.msra.mxu0 %v413
        %441 = vmatprep.subr.mxu0 0.0
        %442 = vmatpush1.msra.mxu0 %v414
        %443 = vmatprep.subr.mxu0 0.0
        %444 = vmatpush1.msra.mxu0 %v415
        %445 = vmatprep.subr.mxu0 0.0
        %446 = vmatpush1.msra.mxu0 %v416
        %447 = vmatprep.subr.mxu0 0.0
        %448 = vmatpush1.msra.mxu0 %v417
        %449 = vmatprep.subr.mxu0 0.0
        %450 = vmatpush1.msra.mxu0 %v418
        %451 = vmatprep.subr.mxu0 0.0
        %452 = vmatpush1.msra.mxu0 %v419
        %453 = vmatprep.subr.mxu0 0.0
        %454 = vmatpush1.msra.mxu0 %v420
        %455 = vmatprep.subr.mxu0 0.0
        %456 = vmatpush1.msra.mxu0 %v421
        %457 = vmatprep.subr.mxu0 0.0
        %458 = vmatpush1.msra.mxu0 %v422
        %459 = vmatprep.subr.mxu0 0.0
        %460 = vmatpush1.msra.mxu0 %v423
        %461 = vmatprep.subr.mxu0 0.0
        %462 = vmatpush1.msra.mxu0 %v424
        %463 = vmatprep.subr.mxu0 0.0
        %464 = vmatpush1.msra.mxu0 %v425
        %465 = vmatprep.subr.mxu0 0.0
        %466 = vmatpush1.msra.mxu0 0.0
        %467 = vmatprep.subr.mxu0 0.0
        %468 = vmatpush1.msra.mxu0 0.0
        %469 = vmatprep.subr.mxu0 0.0
        %470 = vmatpush1.msra.mxu0 0.0
        %471 = vmatprep.subr.mxu0 0.0
        %472 = vmatpush1.msra.mxu0 0.0
        %473 = vmatprep.subr.mxu0 0.0
        %474 = vmatpush1.msra.mxu0 0.0
        %475 = vmatprep.subr.mxu0 0.0
        %476 = vmatpush1.msra.mxu0 0.0
        %477 = vmatprep.subr.mxu0 0.0
        %478 = vmatpush1.msra.mxu0 0.0
        %479 = vmatprep.subr.mxu0 0.0
        %480 = vmatpush1.msra.mxu0 0.0
        %481 = vmatprep.subr.mxu0 0.0
        %482 = vmatpush1.msra.mxu0 0.0
        %483 = vmatprep.subr.mxu0 0.0
        %484 = vmatpush1.msra.mxu0 0.0
        %485 = vmatprep.subr.mxu0 0.0
        %486 = vmatpush1.msra.mxu0 0.0
        %487 = vmatprep.subr.mxu0 0.0
        %488 = vmatpush1.msra.mxu0 0.0
        %489 = vmatprep.subr.mxu0 0.0
        %490 = vmatpush1.msra.mxu0 0.0
        %491 = vmatprep.subr.mxu0 0.0
        %492 = vmatpush1.msra.mxu0 0.0
        %493 = vmatprep.subr.mxu0 0.0
        %494 = vmatpush1.msra.mxu0 0.0
        %495 = vmatprep.subr.mxu0 0.0
        %496 = vmatpush1.msra.mxu0 0.0
        %497 = vmatprep.mubr.f32.mxu0 0.0
        %498 = vmatmul.mubr.f32.gmra.mrb[0].mxu0 %v408
        %v499 = vpop.f32.mrb[0].mxu0
        %v500 = vadd.f32 %v431, %v499
        %v501 = vpop.f32.mrb[0].mxu0
        %502 = vmatprep.mubr.f32.mxu0 0.0
        %503 = vmatmul.mubr.f32.gmra.mrb[0].mxu0 %v409
        %v504 = vpop.f32.mrb[0].mxu0
        %v505 = vadd.f32 %v431, %v504
        %v506 = vpop.f32.mrb[0].mxu0
        %507 = vdwg.mxu0
        %v508 = vmax.f32 %v500, 0.0
        %v509 = vmax.f32 %v505, 0.0
        %v510 = vld [vmem:[#allocation5] sm:$0xff]
        %v511 = vld [vmem:[#allocation5 + $0x8] sm:$0xff]
        %v512 = vld [vmem:[#allocation5 + $0x10] sm:$0xff]
        %v513 = vld [vmem:[#allocation5 + $0x18] sm:$0xff]
        %v514 = vld [vmem:[#allocation5 + $0x20] sm:$0xff]
        %v515 = vld [vmem:[#allocation5 + $0x28] sm:$0xff]
        %v516 = vld [vmem:[#allocation5 + $0x30] sm:$0xff]
        %v517 = vld [vmem:[#allocation5 + $0x38] sm:$0xff]
        %v518 = vld [vmem:[#allocation5 + $0x40] sm:$0xff]
        %v519 = vld [vmem:[#allocation5 + $0x48] sm:$0xff]
        %v520 = vld [vmem:[#allocation5 + $0x50] sm:$0xff]
        %v521 = vld [vmem:[#allocation5 + $0x58] sm:$0xff]
        %v522 = vld [vmem:[#allocation5 + $0x60] sm:$0xff]
        %v523 = vld [vmem:[#allocation5 + $0x68] sm:$0xff]
        %v524 = vld [vmem:[#allocation5 + $0x70] sm:$0xff]
        %v525 = vld [vmem:[#allocation5 + $0x78] sm:$0xff]
        %v526 = vld [vmem:[%s6] sm:$0x1]
        %v528 = vlaneseq
        %v529 = vshrl.u32 %v528, 7
        %v530 = vsub.s32 0, %v529
        %v531 = vrot.slane %v526, %v530
        %533 = vmatprep.subr.mxu0 0.0
        %534 = vmatpush1.msra.mxu0 %v510
        %535 = vmatprep.subr.mxu0 0.0
        %536 = vmatpush1.msra.mxu0 %v511
        %537 = vmatprep.subr.mxu0 0.0
        %538 = vmatpush1.msra.mxu0 %v512
        %539 = vmatprep.subr.mxu0 0.0
        %540 = vmatpush1.msra.mxu0 %v513
        %541 = vmatprep.subr.mxu0 0.0
        %542 = vmatpush1.msra.mxu0 %v514
        %543 = vmatprep.subr.mxu0 0.0
        %544 = vmatpush1.msra.mxu0 %v515
        %545 = vmatprep.subr.mxu0 0.0
        %546 = vmatpush1.msra.mxu0 %v516
        %547 = vmatprep.subr.mxu0 0.0
        %548 = vmatpush1.msra.mxu0 %v517
        %549 = vmatprep.subr.mxu0 0.0
        %550 = vmatpush1.msra.mxu0 %v518
        %551 = vmatprep.subr.mxu0 0.0
        %552 = vmatpush1.msra.mxu0 %v519
        %553 = vmatprep.subr.mxu0 0.0
        %554 = vmatpush1.msra.mxu0 %v520
        %555 = vmatprep.subr.mxu0 0.0
        %556 = vmatpush1.msra.mxu0 %v521
        %557 = vmatprep.subr.mxu0 0.0
        %558 = vmatpush1.msra.mxu0 %v522
        %559 = vmatprep.subr.mxu0 0.0
        %560 = vmatpush1.msra.mxu0 %v523
        %561 = vmatprep.subr.mxu0 0.0
        %562 = vmatpush1.msra.mxu0 %v524
        %563 = vmatprep.subr.mxu0 0.0
        %564 = vmatpush1.msra.mxu0 %v525
        %565 = vmatprep.subr.mxu0 0.0
        %566 = vmatpush1.msra.mxu0 0.0
        %567 = vmatprep.subr.mxu0 0.0
        %568 = vmatpush1.msra.mxu0 0.0
        %569 = vmatprep.subr.mxu0 0.0
        %570 = vmatpush1.msra.mxu0 0.0
        %571 = vmatprep.subr.mxu0 0.0
        %572 = vmatpush1.msra.mxu0 0.0
        %573 = vmatprep.subr.mxu0 0.0
        %574 = vmatpush1.msra.mxu0 0.0
        %575 = vmatprep.subr.mxu0 0.0
        %576 = vmatpush1.msra.mxu0 0.0
        %577 = vmatprep.subr.mxu0 0.0
        %578 = vmatpush1.msra.mxu0 0.0
        %579 = vmatprep.subr.mxu0 0.0
        %580 = vmatpush1.msra.mxu0 0.0
        %581 = vmatprep.subr.mxu0 0.0
        %582 = vmatpush1.msra.mxu0 0.0
        %583 = vmatprep.subr.mxu0 0.0
        %584 = vmatpush1.msra.mxu0 0.0
        %585 = vmatprep.subr.mxu0 0.0
        %586 = vmatpush1.msra.mxu0 0.0
        %587 = vmatprep.subr.mxu0 0.0
        %588 = vmatpush1.msra.mxu0 0.0
        %589 = vmatprep.subr.mxu0 0.0
        %590 = vmatpush1.msra.mxu0 0.0
        %591 = vmatprep.subr.mxu0 0.0
        %592 = vmatpush1.msra.mxu0 0.0
        %593 = vmatprep.subr.mxu0 0.0
        %594 = vmatpush1.msra.mxu0 0.0
        %595 = vmatprep.subr.mxu0 0.0
        %596 = vmatpush1.msra.mxu0 0.0
        %597 = vmatprep.mubr.f32.mxu0 0.0
        %598 = vmatmul.mubr.f32.gmra.mrb[0].mxu0 %v508
        %v599 = vpop.f32.mrb[0].mxu0
        %v600 = vadd.f32 %v531, %v599
        %v601 = vpop.f32.mrb[0].mxu0
        %602 = vmatprep.mubr.f32.mxu0 0.0
        %603 = vmatmul.mubr.f32.gmra.mrb[0].mxu0 %v509
        %v604 = vpop.f32.mrb[0].mxu0
        %v605 = vadd.f32 %v531, %v604
        %v606 = vpop.f32.mrb[0].mxu0
        %607 = vdwg.mxu0
        %v608 = vmax.f32 %v600, 0.0
        %v609 = vmax.f32 %v605, 0.0
        %v610 = vld [vmem:[#allocation7] sm:$0xff]
        %v611 = vld [vmem:[#allocation7 + $0x8] sm:$0xff]
        %v612 = vld [vmem:[#allocation7 + $0x10] sm:$0xff]
        %v613 = vld [vmem:[#allocation7 + $0x18] sm:$0xff]
        %v614 = vld [vmem:[#allocation7 + $0x20] sm:$0xff]
        %v615 = vld [vmem:[#allocation7 + $0x28] sm:$0xff]
        %v616 = vld [vmem:[#allocation7 + $0x30] sm:$0xff]
        %v617 = vld [vmem:[#allocation7 + $0x38] sm:$0xff]
        %v618 = vld [vmem:[#allocation7 + $0x40] sm:$0xff]
        %v619 = vld [vmem:[#allocation7 + $0x48] sm:$0xff]
        %v620 = vld [vmem:[#allocation7 + $0x50] sm:$0xff]
        %v621 = vld [vmem:[#allocation7 + $0x58] sm:$0xff]
        %v622 = vld [vmem:[#allocation7 + $0x60] sm:$0xff]
        %v623 = vld [vmem:[#allocation7 + $0x68] sm:$0xff]
        %v624 = vld [vmem:[#allocation7 + $0x70] sm:$0xff]
        %v625 = vld [vmem:[#allocation7 + $0x78] sm:$0xff]
        %v626 = vld [vmem:[%s8] sm:$0x1]
        %v628 = vlaneseq
        %v629 = vshrl.u32 %v628, 7
        %v630 = vsub.s32 0, %v629
        %v631 = vrot.slane %v626, %v630
        %633 = vmatprep.subr.mxu0 0.0
        %634 = vmatpush1.msra.mxu0 %v610
        %635 = vmatprep.subr.mxu0 0.0
        %636 = vmatpush1.msra.mxu0 %v611
        %637 = vmatprep.subr.mxu0 0.0
        %638 = vmatpush1.msra.mxu0 %v612
        %639 = vmatprep.subr.mxu0 0.0
        %640 = vmatpush1.msra.mxu0 %v613
        %641 = vmatprep.subr.mxu0 0.0
        %642 = vmatpush1.msra.mxu0 %v614
        %643 = vmatprep.subr.mxu0 0.0
        %644 = vmatpush1.msra.mxu0 %v615
        %645 = vmatprep.subr.mxu0 0.0
        %646 = vmatpush1.msra.mxu0 %v616
        %647 = vmatprep.subr.mxu0 0.0
        %648 = vmatpush1.msra.mxu0 %v617
        %649 = vmatprep.subr.mxu0 0.0
        %650 = vmatpush1.msra.mxu0 %v618
        %651 = vmatprep.subr.mxu0 0.0
        %652 = vmatpush1.msra.mxu0 %v619
        %653 = vmatprep.subr.mxu0 0.0
        %654 = vmatpush1.msra.mxu0 %v620
        %655 = vmatprep.subr.mxu0 0.0
        %656 = vmatpush1.msra.mxu0 %v621
        %657 = vmatprep.subr.mxu0 0.0
        %658 = vmatpush1.msra.mxu0 %v622
        %659 = vmatprep.subr.mxu0 0.0
        %660 = vmatpush1.msra.mxu0 %v623
        %661 = vmatprep.subr.mxu0 0.0
        %662 = vmatpush1.msra.mxu0 %v624
        %663 = vmatprep.subr.mxu0 0.0
        %664 = vmatpush1.msra.mxu0 %v625
        %665 = vmatprep.subr.mxu0 0.0
        %666 = vmatpush1.msra.mxu0 0.0
        %667 = vmatprep.subr.mxu0 0.0
        %668 = vmatpush1.msra.mxu0 0.0
        %669 = vmatprep.subr.mxu0 0.0
        %670 = vmatpush1.msra.mxu0 0.0
        %671 = vmatprep.subr.mxu0 0.0
        %672 = vmatpush1.msra.mxu0 0.0
        %673 = vmatprep.subr.mxu0 0.0
        %674 = vmatpush1.msra.mxu0 0.0
        %675 = vmatprep.subr.mxu0 0.0
        %676 = vmatpush1.msra.mxu0 0.0
        %677 = vmatprep.subr.mxu0 0.0
        %678 = vmatpush1.msra.mxu0 0.0
        %679 = vmatprep.subr.mxu0 0.0
        %680 = vmatpush1.msra.mxu0 0.0
        %681 = vmatprep.subr.mxu0 0.0
        %682 = vmatpush1.msra.mxu0 0.0
        %683 = vmatprep.subr.mxu0 0.0
        %684 = vmatpush1.msra.mxu0 0.0
        %685 = vmatprep.subr.mxu0 0.0
        %686 = vmatpush1.msra.mxu0 0.0
        %687 = vmatprep.subr.mxu0 0.0
        %688 = vmatpush1.msra.mxu0 0.0
        %689 = vmatprep.subr.mxu0 0.0
        %690 = vmatpush1.msra.mxu0 0.0
        %691 = vmatprep.subr.mxu0 0.0
        %692 = vmatpush1.msra.mxu0 0.0
        %693 = vmatprep.subr.mxu0 0.0
        %694 = vmatpush1.msra.mxu0 0.0
        %695 = vmatprep.subr.mxu0 0.0
        %696 = vmatpush1.msra.mxu0 0.0
        %697 = vmatprep.mubr.f32.mxu0 0.0
        %698 = vmatmul.mubr.f32.gmra.mrb[0].mxu0 %v608
        %v699 = vpop.f32.mrb[0].mxu0
        %v700 = vadd.f32 %v631, %v699
        %v701 = vpop.f32.mrb[0].mxu0
        %702 = vmatprep.mubr.f32.mxu0 0.0
        %703 = vmatmul.mubr.f32.gmra.mrb[0].mxu0 %v609
        %v704 = vpop.f32.mrb[0].mxu0
        %v705 = vadd.f32 %v631, %v704
        %v706 = vpop.f32.mrb[0].mxu0
        %707 = vdwg.mxu0
        %708 = vst [vmem:[%s370] sm:$0xff] %v700
        %709 = vst [vmem:[%s370 + $0x8] sm:$0xff] %v705
        %s710 = sand.u32 %s227, 1
        %s711 = scalar_lea.sflag [#allocation4], %s710
        %s712 = sand.u32 %s227, 1
        %s713 = smul.addr %s712, 16
        %s714 = scalar_lea.vmem [#allocation8], %s713
        // Predicated region
        $region69: #{tpu_custom_call.1} parent=55 // pred_check
          %p715 = pneg %p237
        $region70: #{tpu_custom_call.1} parent=55 // pred_check_branch
          %717 = sbr.rel (%p715) target = $region72
        $region71: #{tpu_custom_call.1} parent=55 // pred_region
          %s718 = smul.u32 2, %s25
          %s720 = ssub.s32 256, 256
          %721 = vsyncadd %s711, %s720
          %s722 = smul.addr %s718, 128
          %s723 = scalar_lea.hbm %s9, %s722
          %s724 = sshll.u32 %s714, 4
          %s725 = int_to_ptr.vmem [resolvable:$true] %s724
          %730 = dma.vmem_to_hbm [thread:$0]  %s725, 256, %s723, %s711, 128, 128, 8
        $region72: #{tpu_custom_call.1} parent=55 // pred_fallthru
          _
      $region56: #{tpu_custom_call.1} parent=5 // pred_fallthru
        _
      %p731 = scmp.le.s32.totalorder 2, %s20
      // Predicated region
      $region73: #{tpu_custom_call.1} parent=5 // pred_check
        %p732 = pneg %p731
      $region74: #{tpu_custom_call.1} parent=5 // pred_check_branch
        %734 = sbr.rel (%p732) target = $region76
      $region75: #{tpu_custom_call.1} parent=5 // pred_region
        %s735 = ssub.s32 %s20, 2
        // Predicated region
        $region77: #{tpu_custom_call.1} parent=75 // pred_check
          %p736 = pneg %p243
        $region78: #{tpu_custom_call.1} parent=75 // pred_check_branch
          %738 = sbr.rel (%p736) target = $region80
        $region79: #{tpu_custom_call.1} parent=75 // pred_region
          %s739 = sand.u32 %s228, 1
          %s740 = scalar_lea.sflag [#allocation4], %s739
          %s741 = sand.u32 %s228, 1
          %s742 = smul.addr %s741, 16
          %s743 = scalar_lea.vmem [#allocation8], %s742
          %744 = dma.done %s740, 256
        $region80: #{tpu_custom_call.1} parent=75 // pred_fallthru
          _
      $region76: #{tpu_custom_call.1} parent=5 // pred_fallthru
        _
    $region6: #{tpu_custom_call.1} parent=1 // loop_footer
      %s24 = sadd.s32 1, %s20
    $region7: #{tpu_custom_call.1} parent=1 // loop_footer_branch
      %19 = sbr.rel target = $region3
    $region8: #{tpu_custom_call.1} parent=1 // loop_exit
      _
    %745 = vsyncpa [#allocation3], 1
    %s746 = scalar_lea.sflag [#allocation3], 1
    %747 = vsyncpa %s746, 1
    %748 = vsyncpa [#allocation6], 1
    %749 = vsyncpa [#allocation4], 1
    %s750 = scalar_lea.sflag [#allocation4], 1
    %751 = vsyncpa %s750, 1

</llo_original>
